<compile_context>
chip_gen: v5e
topology: v5e:2x2
jax: 0.10.0
libtpu: 0.0.40
codegen_flags: <defaults>
</compile_context>

<pallas_src>
import jax
import jax.numpy as jnp
import numpy as np
from jax import lax
from jax.experimental import pallas as pl
from jax.experimental.pallas import tpu as pltpu

EPS = 1e-5  # nn.BatchNorm3d default eps
# Explicit scoped-VMEM budget: well above the 16/32 MiB defaults, safely below
# v7x's 64 MiB physical per-core VMEM.
_VMEM_LIMIT = 48 * 1024 * 1024


def _cparams(semantics):
    return pltpu.CompilerParams(dimension_semantics=semantics,
                                vmem_limit_bytes=_VMEM_LIMIT)


def _pick_tile(n, cap):
    """Largest divisor of n that is <= cap and a multiple of 8 (fallback: n)."""
    cap = min(n, cap)
    for t in range(cap, 0, -1):
        if n % t == 0 and (t % 8 == 0 or t == n):
            return t
    return n


# ----------------------------- Pass 1: squeeze ------------------------------
def squeeze_kernel(x_ref, w_ref, o_ref, st_ref):
    # 1x1x1 conv == matmul.  Conv bias omitted: cancelled exactly by train BN.
    y = jnp.dot(x_ref[...], w_ref[...], preferred_element_type=jnp.float32)
    o_ref[...] = y
    st_ref[...] = jnp.concatenate(
        [jnp.sum(y, axis=0, keepdims=True),
         jnp.sum(y * y, axis=0, keepdims=True)], axis=0)


# ------------------------- Pass 2: fused expand conv ------------------------
def make_expand_kernel(H, W, Csq, D):
    def kernel(p0_ref, p1_ref, p2_ref, w_ref, sc_ref, sh_ref, o_ref, st_ref):
        d = pl.program_id(1)
        sc = jnp.reshape(sc_ref[...], (1, 1, Csq))
        sh = jnp.reshape(sh_ref[...], (1, 1, Csq))
        ri = lax.broadcasted_iota(jnp.int32, (H + 2, W + 2, 1), 0)
        ci = lax.broadcasted_iota(jnp.int32, (H + 2, W + 2, 1), 1)
        hw_mask = (ri >= 1) & (ri <= H) & (ci >= 1) & (ci <= W)
        planes = (p0_ref, p1_ref, p2_ref)
        cols = []
        for kd in range(3):
            raw = planes[kd][...]                      # (H+2, W+2, Csq) pre-BN
            s = jnp.maximum(raw * sc + sh, 0.0)        # squeeze BN + ReLU
            pd = d + kd                                # padded-depth plane idx
            valid = hw_mask & (pd >= 1) & (pd <= D)    # zero the halo voxels
            s = jnp.where(valid, s, 0.0)
            for kh in range(3):
                for kw in range(3):
                    cols.append(s[kh:kh + H, kw:kw + W, :])
        patch = jnp.concatenate(cols, axis=-1).reshape(H * W, 27 * Csq)
        acc = jnp.dot(patch, w_ref[...], preferred_element_type=jnp.float32)
        o_ref[...] = acc                               # raw (pre-BN) expand out
        st_ref[...] = jnp.concatenate(
            [jnp.sum(acc, axis=0, keepdims=True),
             jnp.sum(acc * acc, axis=0, keepdims=True)], axis=0)
    return kernel


# --------------------- Pass 3: expand BN (+ bypass) + ReLU ------------------
def out_kernel(e_ref, sc_ref, sh_ref, o_ref):
    o_ref[...] = jnp.maximum(e_ref[...] * sc_ref[...] + sh_ref[...], 0.0)


def out_kernel_bypass(e_ref, x_ref, sc_ref, sh_ref, o_ref):
    o_ref[...] = jnp.maximum(e_ref[...] * sc_ref[...] + sh_ref[...] + x_ref[...], 0.0)


def _scale_shift(stats, count, gamma, beta):
    # stats: (2, C) = [sum, sumsq] accumulated in f32 over all M voxels.
    mean = stats[0:1] / count
    var = stats[1:2] / count - mean * mean
    scale = gamma * lax.rsqrt(var + EPS)
    shift = beta - mean * scale
    return scale, shift


# ------------------------------ wrapper -------------------------------------
def fire_forward(x_ndhwc, p, use_bypass=False):
    N, D, H, W, Cin = x_ndhwc.shape
    Csq = p["w_sq_mat"].shape[1]
    Ce = p["w_exp_packed"].shape[1]          # Ce1 + Ce3 (merged)
    M = N * D * H * W
    x2 = x_ndhwc.reshape(M, Cin)

    # ------------- Pass 1: squeeze matmul + partial BN stats ----------------
    TM = _pick_tile(M, 2048)
    n_tiles = M // TM
    sq_raw, sq_pstats = pl.pallas_call(
        squeeze_kernel,
        out_shape=(jax.ShapeDtypeStruct((M, Csq), jnp.float32),
                   jax.ShapeDtypeStruct((n_tiles, 2, Csq), jnp.float32)),
        grid=(n_tiles,),
        in_specs=[pl.BlockSpec((TM, Cin), lambda i: (i, 0)),
                  pl.BlockSpec((Cin, Csq), lambda i: (0, 0))],
        out_specs=(pl.BlockSpec((TM, Csq), lambda i: (i, 0)),
                   pl.BlockSpec((None, 2, Csq), lambda i: (i, 0, 0))),
        compiler_params=_cparams(("parallel",)),
    )(x2, p["w_sq_mat"])

    # glue: global squeeze BN scale/shift + 1-voxel zero pad of RAW activation
    sq_scale, sq_shift = _scale_shift(sq_pstats.sum(axis=0), M,
                                      p["g_sq"], p["be_sq"])
    sp = jnp.pad(sq_raw.reshape(N, D, H, W, Csq),
                 ((0, 0), (1, 1), (1, 1), (1, 1), (0, 0)))

    # ------- Pass 2: (squeeze BN+ReLU) fused into expand conv + stats -------
    # NOTE: one padded (H+2, W+2, Csq) plane per depth-tap is assumed to fit
    # VMEM; a D-slab halo via manual make_async_copy would cut the 3x plane
    # re-read for very large H*W.
    expand_kernel = make_expand_kernel(H, W, Csq, D)

    def plane_spec(k):
        return pl.BlockSpec((None, None, H + 2, W + 2, Csq),
                            lambda n, d, _k=k: (n, d + _k, 0, 0, 0))

    eo_raw, e_pstats = pl.pallas_call(
        expand_kernel,
        out_shape=(jax.ShapeDtypeStruct((N, D, H * W, Ce), jnp.float32),
                   jax.ShapeDtypeStruct((N, D, 2, Ce), jnp.float32)),
        grid=(N, D),
        in_specs=[plane_spec(0), plane_spec(1), plane_spec(2),
                  pl.BlockSpec((27 * Csq, Ce), lambda n, d: (0, 0)),
                  pl.BlockSpec((1, Csq), lambda n, d: (0, 0)),
                  pl.BlockSpec((1, Csq), lambda n, d: (0, 0))],
        out_specs=(pl.BlockSpec((None, None, H * W, Ce), lambda n, d: (n, d, 0, 0)),
                   pl.BlockSpec((None, None, 2, Ce), lambda n, d: (n, d, 0, 0))),
        compiler_params=_cparams(("parallel", "parallel")),
    )(sp, sp, sp, p["w_exp_packed"], sq_scale, sq_shift)

    # glue: global expand BN scale/shift (e1 and e3 channels concatenated)
    g_e = jnp.concatenate([p["g_e1"], p["g_e3"]], axis=1)
    be_e = jnp.concatenate([p["be_e1"], p["be_e3"]], axis=1)
    e_scale, e_shift = _scale_shift(e_pstats.sum(axis=(0, 1)), M, g_e, be_e)

    # ------------- Pass 3: expand BN + optional bypass + ReLU ---------------
    # Lane-dense view: (M, Ce) -> (M*Ce/128, 128) (contiguous reshape, free).
    if Ce <= 128 and 128 % Ce == 0 and M % (128 // Ce) == 0:
        lanes, rep = 128, 128 // Ce
    else:
        lanes, rep = Ce, 1
    rows = (M * Ce) // lanes
    e_flat = eo_raw.reshape(rows, lanes)
    sc_l = jnp.tile(e_scale, (1, rep))
    sh_l = jnp.tile(e_shift, (1, rep))
    TR = _pick_tile(rows, 1024)
    nr = rows // TR

    if use_bypass:
        if Cin != Ce:
            raise ValueError("bypass requires inplanes == expand1x1 + expand3x3")
        xb = x2.reshape(rows, lanes)
        kernel, args = out_kernel_bypass, (e_flat, xb, sc_l, sh_l)
        in_specs = [pl.BlockSpec((TR, lanes), lambda i: (i, 0)),
                    pl.BlockSpec((TR, lanes), lambda i: (i, 0)),
                    pl.BlockSpec((1, lanes), lambda i: (0, 0)),
                    pl.BlockSpec((1, lanes), lambda i: (0, 0))]
    else:
        kernel, args = out_kernel, (e_flat, sc_l, sh_l)
        in_specs = [pl.BlockSpec((TR, lanes), lambda i: (i, 0)),
                    pl.BlockSpec((1, lanes), lambda i: (0, 0)),
                    pl.BlockSpec((1, lanes), lambda i: (0, 0))]

    out_flat = pl.pallas_call(
        kernel,
        out_shape=jax.ShapeDtypeStruct((rows, lanes), jnp.float32),
        grid=(nr,),
        in_specs=in_specs,
        out_specs=pl.BlockSpec((TR, lanes), lambda i: (i, 0)),
        compiler_params=_cparams(("parallel",)),
    )(*args)
    return out_flat.reshape(N, D, H, W, Ce)


# -------------------- deterministic parameter init --------------------------
def init_params(key, inplanes, squeeze_planes, e1_planes, e3_planes):
    ks = jax.random.split(key, 6)
    # PyTorch Conv3d weight shapes: (out_ch, in_ch, kD, kH, kW)
    w_sq = jax.random.normal(ks[0], (squeeze_planes, inplanes, 1, 1, 1), jnp.float32) * 0.2
    b_sq = jax.random.normal(ks[1], (squeeze_planes,), jnp.float32) * 0.1
    w_e1 = jax.random.normal(ks[2], (e1_planes, squeeze_planes, 1, 1, 1), jnp.float32) * 0.2
    b_e1 = jax.random.normal(ks[3], (e1_planes,), jnp.float32) * 0.1
    w_e3 = jax.random.normal(ks[4], (e3_planes, squeeze_planes, 3, 3, 3), jnp.float32) * 0.1
    b_e3 = jax.random.normal(ks[5], (e3_planes,), jnp.float32) * 0.1

    def bn_init(c):  # nn.BatchNorm3d.__init__: weight=1, bias=0
        return jnp.ones((1, c), jnp.float32), jnp.zeros((1, c), jnp.float32)

    g_sq, be_sq = bn_init(squeeze_planes)
    g_e1, be_e1 = bn_init(e1_planes)
    g_e3, be_e3 = bn_init(e3_planes)

    w_sq_mat = jnp.transpose(w_sq[:, :, 0, 0, 0], (1, 0))            # (Cin, Csq)
    w_e1_mat = jnp.transpose(w_e1[:, :, 0, 0, 0], (1, 0))            # (Csq, Ce1)
    w_e3_dhwio = jnp.transpose(w_e3, (2, 3, 4, 1, 0))                # (3,3,3,Csq,Ce3)
    w_e3_mat = w_e3_dhwio.reshape(27 * squeeze_planes, e3_planes)    # tap-major rows

    # Packed expand weight: expand1x1 occupies the centre-tap rows of the
    # first Ce1 columns; expand3x3 fills the last Ce3 columns for all 27 taps.
    center = 13  # kd=kh=kw=1 -> tap index 1*9 + 1*3 + 1
    Csq = squeeze_planes
    w_packed = jnp.zeros((27 * Csq, e1_planes + e3_planes), jnp.float32)
    w_packed = w_packed.at[center * Csq:(center + 1) * Csq, :e1_planes].set(w_e1_mat)
    w_packed = w_packed.at[:, e1_planes:].set(w_e3_mat)

    return dict(
        w_sq_mat=w_sq_mat, w_e1_mat=w_e1_mat, w_e3_dhwio=w_e3_dhwio,
        w_exp_packed=w_packed,
        b_sq=b_sq.reshape(1, -1), b_e1=b_e1.reshape(1, -1), b_e3=b_e3.reshape(1, -1),
        g_sq=g_sq, be_sq=be_sq, g_e1=g_e1, be_e1=be_e1, g_e3=g_e3, be_e3=be_e3,
    )


# -------------------------- pure-JAX reference ------------------------------
def fire_reference(x, p, use_bypass=False):
    def bn(y, g, b):
        mean = y.mean(axis=(0, 1, 2, 3), keepdims=True)
        var = ((y - mean) ** 2).mean(axis=(0, 1, 2, 3), keepdims=True)
        return g * (y - mean) * lax.rsqrt(var + EPS) + b

    s = jnp.tensordot(x, p["w_sq_mat"], axes=([4], [0])) + p["b_sq"]
    s = jnp.maximum(bn(s, p["g_sq"], p["be_sq"]), 0.0)
    e1 = jnp.tensordot(s, p["w_e1_mat"], axes=([4], [0])) + p["b_e1"]
    e1 = bn(e1, p["g_e1"], p["be_e1"])
    e3 = lax.conv_general_dilated(
        s, p["w_e3_dhwio"], (1, 1, 1), ((1, 1), (1, 1), (1, 1)),
        dimension_numbers=("NDHWC", "DHWIO", "NDHWC"),
        precision=lax.Precision.HIGHEST) + p["b_e3"]
    e3 = bn(e3, p["g_e3"], p["be_e3"])
    out = jnp.concatenate([e1, e3], axis=-1)
    if use_bypass:
        out = out + x
    return jnp.maximum(out, 0.0)


if __name__ == "__main__":
    key = jax.random.PRNGKey(0)
    kx, kp = jax.random.split(key)

    # Fire(inplanes=8, squeeze_planes=4, expand1x1_planes=8, expand3x3_planes=8)
    N, Cin, D, H, W = 2, 8, 4, 8, 8
    squeeze_planes, e1_planes, e3_planes = 4, 8, 8

    # PyTorch input layout is NCDHW; permute to the kernels' NDHWC layout.
    x_ncdhw = jax.random.normal(kx, (N, Cin, D, H, W), jnp.float32)
    x = jnp.transpose(x_ncdhw, (0, 2, 3, 4, 1))

    params = init_params(kp, Cin, squeeze_planes, e1_planes, e3_planes)

    out = jax.block_until_ready(fire_forward(x, params, use_bypass=False))
    ref = fire_reference(x, params, use_bypass=False)
    np.testing.assert_allclose(np.asarray(out), np.asarray(ref),
                               rtol=1e-2, atol=1e-2)
    print("KERNEL_OK")
</pallas_src>

<mosaic_0001>
module attributes {stable_mosaic.version = 11 : i64} {
  func.func @squeeze_kernel(%arg0: i32, %arg1: memref<512x8xf32, #tpu.memory_space<vmem>>, %arg2: memref<8x4xf32, #tpu.memory_space<vmem>>, %arg3: memref<512x4xf32, #tpu.memory_space<vmem>>, %arg4: memref<1x2x4xf32, #tpu.memory_space<vmem>>) attributes {dimension_semantics = [#tpu.dimension_semantics<parallel>], iteration_bounds = array<i64: 1>, scalar_prefetch = 0 : i64, scratch_operands = 0 : i64, tpu.core_type = #tpu.core_type<tc>, window_params = [{transform_indices = @transform_0, window_bounds = array<i64: 512, 8>}, {pipeline_mode = #tpu.pipeline_mode<synchronous>, transform_indices = @transform_1, window_bounds = array<i64: 8, 4>}, {transform_indices = @transform_2, window_bounds = array<i64: 512, 4>}, {transform_indices = @transform_3, window_bounds = array<i64: 1, 2, 4>}]} {
    %c0 = arith.constant 0 : index
    %c0_0 = arith.constant 0 : index
    %0 = vector.load %arg1[%c0, %c0_0] : memref<512x8xf32, #tpu.memory_space<vmem>>, vector<512x8xf32>
    %c0_1 = arith.constant 0 : index
    %c0_2 = arith.constant 0 : index
    %1 = vector.load %arg2[%c0_1, %c0_2] : memref<8x4xf32, #tpu.memory_space<vmem>>, vector<8x4xf32>
    %cst = arith.constant dense<0.000000e+00> : vector<512x4xf32>
    %2 = tpu.matmul %0, %1, %cst {dimension_numbers = #tpu.dot_dimension_numbers<[1], [0], [0], [1], [0, 0, 1, 1], [], []>} : vector<512x8xf32>, vector<8x4xf32>, vector<512x4xf32> -> vector<512x4xf32>
    %c0_3 = arith.constant 0 : index
    %c0_4 = arith.constant 0 : index
    %3 = vector.load %arg3[%c0_3, %c0_4] : memref<512x4xf32, #tpu.memory_space<vmem>>, vector<512x4xf32>
    tpu.vector_store %arg3[%c0_3, %c0_4], %2 {strides = array<i32>} : memref<512x4xf32, #tpu.memory_space<vmem>>, vector<512x4xf32>,
    %cst_5 = arith.constant dense<0.000000e+00> : vector<4xf32>
    %4 = vector.multi_reduction <add>, %2, %cst_5 [0] : vector<512x4xf32> to vector<4xf32>
    %5 = vector.shape_cast %4 : vector<4xf32> to vector<1x4xf32>
    %6 = arith.mulf %2, %2 : vector<512x4xf32>
    %cst_6 = arith.constant dense<0.000000e+00> : vector<4xf32>
    %7 = vector.multi_reduction <add>, %6, %cst_6 [0] : vector<512x4xf32> to vector<4xf32>
    %8 = vector.shape_cast %7 : vector<4xf32> to vector<1x4xf32>
    %9 = tpu.concatenate %5, %8 in 0 : vector<1x4xf32>, vector<1x4xf32> -> vector<2x4xf32>
    %c0_7 = arith.constant 0 : index
    %c0_8 = arith.constant 0 : index
    %c0_9 = arith.constant 0 : index
    %10 = vector.load %arg4[%c0_7, %c0_8, %c0_9] : memref<1x2x4xf32, #tpu.memory_space<vmem>>, vector<1x2x4xf32>
    %11 = vector.shape_cast %10 : vector<1x2x4xf32> to vector<2x4xf32>
    %12 = vector.shape_cast %9 : vector<2x4xf32> to vector<1x2x4xf32>
    tpu.vector_store %arg4[%c0_7, %c0_8, %c0_9], %12 {strides = array<i32>} : memref<1x2x4xf32, #tpu.memory_space<vmem>>, vector<1x2x4xf32>,
    return
  }
  func.func @transform_0(%arg0: i32) -> (i32, i32) {
    %c0_i32 = arith.constant 0 : i32
    %c0_i32_0 = arith.constant 0 : i32
    return %arg0, %c0_i32 : i32, i32
  }
  func.func @transform_1(%arg0: i32) -> (i32, i32) {
    %c0_i32 = arith.constant 0 : i32
    %c0_i32_0 = arith.constant 0 : i32
    %c0_i32_1 = arith.constant 0 : i32
    return %c0_i32, %c0_i32_0 : i32, i32
  }
  func.func @transform_2(%arg0: i32) -> (i32, i32) {
    %c0_i32 = arith.constant 0 : i32
    %c0_i32_0 = arith.constant 0 : i32
    return %arg0, %c0_i32 : i32, i32
  }
  func.func @transform_3(%arg0: i32) -> (i32, i32, i32) {
    %c0_i32 = arith.constant 0 : i32
    %c0_i32_0 = arith.constant 0 : i32
    %c0_i32_1 = arith.constant 0 : i32
    return %arg0, %c0_i32, %c0_i32_0 : i32, i32, i32
  }
}

</mosaic_0001>

<llo_original>
// kernel: tpu_custom_call.1
$region0: #{tpu_custom_call.1}
  #allocation0 [shape = 'u32[]', space=smem, size = 0x4, offset = 0x4, fixed_abs, tag = 'smem constant byte address 0x4 - core index']
  #allocation1 [shape = 'u32[72,128]{1,0:T(1,128)}', space=vmem, size = 0x9000, scoped, tag = 'internal scratch']
  %s0 = inlined_call_operand.vmem [shape: f32[512,8], index: 0, kind: input, shape index: {}]
  %s1 = inlined_call_operand.vmem [shape: f32[8,4], index: 1, kind: input, shape index: {}]
  %s2 = inlined_call_operand.vmem [shape: f32[512,4], index: 2, kind: output, shape index: {0}]
  %s3 = inlined_call_operand.hbm [shape: f32[1,2,4], index: 3, kind: output, shape index: {1}]
  %4 = xla_tuple %s2, %s3
  %s5 = sld [smem:[#allocation0]]
  $region26: #{tpu_custom_call.1} parent=0
    _
  %s7 = ssub.s32 1, %s5
  %s8 = scalar_select 0, %s7, %s5
  $region1: #{tpu_custom_call.1} parent=0
    #allocation2 [shape = 'u8[1024]{0}', space=vmem, size = 0x400, scoped, tag = 'output window, operand 1, single buffered']
    #allocation3 [shape = 's32[1]{0}', space=sflag, size = 0x4, scoped, tag = 'scoped memory for tpu_custom_call.1']
    %9 = vsyncpa [#allocation3], 0
    // Predicated region
    $region2: #{tpu_custom_call.1} parent=1 // pred_check
      _
    $region3: #{tpu_custom_call.1} parent=1 // pred_check_branch
      %11 = sbr.rel (0) target = $region5
    $region4: #{tpu_custom_call.1} parent=1 // pred_region
      _
    $region5: #{tpu_custom_call.1} parent=1 // pred_fallthru
      _
    // Predicated region
    $region6: #{tpu_custom_call.1} parent=1 // pred_check
      _
    $region7: #{tpu_custom_call.1} parent=1 // pred_check_branch
      %13 = sbr.rel (0) target = $region9
    $region8: #{tpu_custom_call.1} parent=1 // pred_region
      _
    $region9: #{tpu_custom_call.1} parent=1 // pred_fallthru
      _
    %v14 = vld [vmem:[%s0] sm:$0xff]
    %v15 = vld [vmem:[%s0 + $0x8] sm:$0xff]
    %v16 = vld [vmem:[%s0 + $0x10] sm:$0xff]
    %v17 = vld [vmem:[%s0 + $0x18] sm:$0xff]
    %v18 = vld [vmem:[%s0 + $0x20] sm:$0xff]
    %v19 = vld [vmem:[%s0 + $0x28] sm:$0xff]
    %v20 = vld [vmem:[%s0 + $0x30] sm:$0xff]
    %v21 = vld [vmem:[%s0 + $0x38] sm:$0xff]
    %v22 = vld [vmem:[%s0 + $0x40] sm:$0xff]
    %v23 = vld [vmem:[%s0 + $0x48] sm:$0xff]
    %v24 = vld [vmem:[%s0 + $0x50] sm:$0xff]
    %v25 = vld [vmem:[%s0 + $0x58] sm:$0xff]
    %v26 = vld [vmem:[%s0 + $0x60] sm:$0xff]
    %v27 = vld [vmem:[%s0 + $0x68] sm:$0xff]
    %v28 = vld [vmem:[%s0 + $0x70] sm:$0xff]
    %v29 = vld [vmem:[%s0 + $0x78] sm:$0xff]
    %v30 = vld [vmem:[%s0 + $0x80] sm:$0xff]
    %v31 = vld [vmem:[%s0 + $0x88] sm:$0xff]
    %v32 = vld [vmem:[%s0 + $0x90] sm:$0xff]
    %v33 = vld [vmem:[%s0 + $0x98] sm:$0xff]
    %v34 = vld [vmem:[%s0 + $0xa0] sm:$0xff]
    %v35 = vld [vmem:[%s0 + $0xa8] sm:$0xff]
    %v36 = vld [vmem:[%s0 + $0xb0] sm:$0xff]
    %v37 = vld [vmem:[%s0 + $0xb8] sm:$0xff]
    %v38 = vld [vmem:[%s0 + $0xc0] sm:$0xff]
    %v39 = vld [vmem:[%s0 + $0xc8] sm:$0xff]
    %v40 = vld [vmem:[%s0 + $0xd0] sm:$0xff]
    %v41 = vld [vmem:[%s0 + $0xd8] sm:$0xff]
    %v42 = vld [vmem:[%s0 + $0xe0] sm:$0xff]
    %v43 = vld [vmem:[%s0 + $0xe8] sm:$0xff]
    %v44 = vld [vmem:[%s0 + $0xf0] sm:$0xff]
    %v45 = vld [vmem:[%s0 + $0xf8] sm:$0xff]
    %v46 = vld [vmem:[%s0 + $0x100] sm:$0xff]
    %v47 = vld [vmem:[%s0 + $0x108] sm:$0xff]
    %v48 = vld [vmem:[%s0 + $0x110] sm:$0xff]
    %v49 = vld [vmem:[%s0 + $0x118] sm:$0xff]
    %v50 = vld [vmem:[%s0 + $0x120] sm:$0xff]
    %v51 = vld [vmem:[%s0 + $0x128] sm:$0xff]
    %v52 = vld [vmem:[%s0 + $0x130] sm:$0xff]
    %v53 = vld [vmem:[%s0 + $0x138] sm:$0xff]
    %v54 = vld [vmem:[%s0 + $0x140] sm:$0xff]
    %v55 = vld [vmem:[%s0 + $0x148] sm:$0xff]
    %v56 = vld [vmem:[%s0 + $0x150] sm:$0xff]
    %v57 = vld [vmem:[%s0 + $0x158] sm:$0xff]
    %v58 = vld [vmem:[%s0 + $0x160] sm:$0xff]
    %v59 = vld [vmem:[%s0 + $0x168] sm:$0xff]
    %v60 = vld [vmem:[%s0 + $0x170] sm:$0xff]
    %v61 = vld [vmem:[%s0 + $0x178] sm:$0xff]
    %v62 = vld [vmem:[%s0 + $0x180] sm:$0xff]
    %v63 = vld [vmem:[%s0 + $0x188] sm:$0xff]
    %v64 = vld [vmem:[%s0 + $0x190] sm:$0xff]
    %v65 = vld [vmem:[%s0 + $0x198] sm:$0xff]
    %v66 = vld [vmem:[%s0 + $0x1a0] sm:$0xff]
    %v67 = vld [vmem:[%s0 + $0x1a8] sm:$0xff]
    %v68 = vld [vmem:[%s0 + $0x1b0] sm:$0xff]
    %v69 = vld [vmem:[%s0 + $0x1b8] sm:$0xff]
    %v70 = vld [vmem:[%s0 + $0x1c0] sm:$0xff]
    %v71 = vld [vmem:[%s0 + $0x1c8] sm:$0xff]
    %v72 = vld [vmem:[%s0 + $0x1d0] sm:$0xff]
    %v73 = vld [vmem:[%s0 + $0x1d8] sm:$0xff]
    %v74 = vld [vmem:[%s0 + $0x1e0] sm:$0xff]
    %v75 = vld [vmem:[%s0 + $0x1e8] sm:$0xff]
    %v76 = vld [vmem:[%s0 + $0x1f0] sm:$0xff]
    %v77 = vld [vmem:[%s0 + $0x1f8] sm:$0xff]
    %v78 = vld [vmem:[%s1] sm:$0xff]
    %vm79 = vcmask 64512
    %v81 = vsel %vm79, %v14, 0
    %v84 = vsel %vm79, %v15, 0
    %v87 = vsel %vm79, %v16, 0
    %v90 = vsel %vm79, %v17, 0
    %v93 = vsel %vm79, %v18, 0
    %v96 = vsel %vm79, %v19, 0
    %v99 = vsel %vm79, %v20, 0
    %v102 = vsel %vm79, %v21, 0
    %v105 = vsel %vm79, %v22, 0
    %v108 = vsel %vm79, %v23, 0
    %v111 = vsel %vm79, %v24, 0
    %v114 = vsel %vm79, %v25, 0
    %v117 = vsel %vm79, %v26, 0
    %v120 = vsel %vm79, %v27, 0
    %v123 = vsel %vm79, %v28, 0
    %v126 = vsel %vm79, %v29, 0
    %v129 = vsel %vm79, %v30, 0
    %v132 = vsel %vm79, %v31, 0
    %v135 = vsel %vm79, %v32, 0
    %v138 = vsel %vm79, %v33, 0
    %v141 = vsel %vm79, %v34, 0
    %v144 = vsel %vm79, %v35, 0
    %v147 = vsel %vm79, %v36, 0
    %v150 = vsel %vm79, %v37, 0
    %v153 = vsel %vm79, %v38, 0
    %v156 = vsel %vm79, %v39, 0
    %v159 = vsel %vm79, %v40, 0
    %v162 = vsel %vm79, %v41, 0
    %v165 = vsel %vm79, %v42, 0
    %v168 = vsel %vm79, %v43, 0
    %v171 = vsel %vm79, %v44, 0
    %v174 = vsel %vm79, %v45, 0
    %v177 = vsel %vm79, %v46, 0
    %v180 = vsel %vm79, %v47, 0
    %v183 = vsel %vm79, %v48, 0
    %v186 = vsel %vm79, %v49, 0
    %v189 = vsel %vm79, %v50, 0
    %v192 = vsel %vm79, %v51, 0
    %v195 = vsel %vm79, %v52, 0
    %v198 = vsel %vm79, %v53, 0
    %v201 = vsel %vm79, %v54, 0
    %v204 = vsel %vm79, %v55, 0
    %v207 = vsel %vm79, %v56, 0
    %v210 = vsel %vm79, %v57, 0
    %v213 = vsel %vm79, %v58, 0
    %v216 = vsel %vm79, %v59, 0
    %v219 = vsel %vm79, %v60, 0
    %v222 = vsel %vm79, %v61, 0
    %v225 = vsel %vm79, %v62, 0
    %v228 = vsel %vm79, %v63, 0
    %v231 = vsel %vm79, %v64, 0
    %v234 = vsel %vm79, %v65, 0
    %v237 = vsel %vm79, %v66, 0
    %v240 = vsel %vm79, %v67, 0
    %v243 = vsel %vm79, %v68, 0
    %v246 = vsel %vm79, %v69, 0
    %v249 = vsel %vm79, %v70, 0
    %v252 = vsel %vm79, %v71, 0
    %v255 = vsel %vm79, %v72, 0
    %v258 = vsel %vm79, %v73, 0
    %v261 = vsel %vm79, %v74, 0
    %v264 = vsel %vm79, %v75, 0
    %v267 = vsel %vm79, %v76, 0
    %v270 = vsel %vm79, %v77, 0
    %272 = vmatpush.msra.mxu0 0.0
    %273 = vmatpush.msra.mxu0 0.0
    %274 = vmatpush.msra.mxu0 0.0
    %275 = vmatpush.msra.mxu0 0.0
    %276 = vmatpush.msra.mxu0 0.0
    %277 = vmatpush.msra.mxu0 0.0
    %278 = vmatpush.msra.mxu0 0.0
    %279 = vmatpush.msra.mxu0 0.0
    %280 = vmatpush.msra.mxu0 0.0
    %281 = vmatpush.msra.mxu0 0.0
    %282 = vmatpush.msra.mxu0 0.0
    %283 = vmatpush.msra.mxu0 0.0
    %284 = vmatpush.msra.mxu0 0.0
    %285 = vmatpush.msra.mxu0 0.0
    %286 = vmatpush.msra.mxu0 0.0
    %287 = vmatpush.msra.mxu0 %v78
    %288 = vmatmul.f32.gmra.mxu0 %v81
    %v289 = vpop.f32.mrf.mxu0
    %v290 = vadd.f32 0.0, %v289
    %291 = vmatmul.f32.gmra.mxu0 %v84
    %v292 = vpop.f32.mrf.mxu0
    %v293 = vadd.f32 0.0, %v292
    %294 = vmatmul.f32.gmra.mxu0 %v87
    %v295 = vpop.f32.mrf.mxu0
    %v296 = vadd.f32 0.0, %v295
    %297 = vmatmul.f32.gmra.mxu0 %v90
    %v298 = vpop.f32.mrf.mxu0
    %v299 = vadd.f32 0.0, %v298
    %300 = vmatmul.f32.gmra.mxu0 %v93
    %v301 = vpop.f32.mrf.mxu0
    %v302 = vadd.f32 0.0, %v301
    %303 = vmatmul.f32.gmra.mxu0 %v96
    %v304 = vpop.f32.mrf.mxu0
    %v305 = vadd.f32 0.0, %v304
    %306 = vmatmul.f32.gmra.mxu0 %v99
    %v307 = vpop.f32.mrf.mxu0
    %v308 = vadd.f32 0.0, %v307
    %309 = vmatmul.f32.gmra.mxu0 %v102
    %v310 = vpop.f32.mrf.mxu0
    %v311 = vadd.f32 0.0, %v310
    %312 = vmatmul.f32.gmra.mxu0 %v105
    %v313 = vpop.f32.mrf.mxu0
    %v314 = vadd.f32 0.0, %v313
    %315 = vmatmul.f32.gmra.mxu0 %v108
    %v316 = vpop.f32.mrf.mxu0
    %v317 = vadd.f32 0.0, %v316
    %318 = vmatmul.f32.gmra.mxu0 %v111
    %v319 = vpop.f32.mrf.mxu0
    %v320 = vadd.f32 0.0, %v319
    %321 = vmatmul.f32.gmra.mxu0 %v114
    %v322 = vpop.f32.mrf.mxu0
    %v323 = vadd.f32 0.0, %v322
    %324 = vmatmul.f32.gmra.mxu0 %v117
    %v325 = vpop.f32.mrf.mxu0
    %v326 = vadd.f32 0.0, %v325
    %327 = vmatmul.f32.gmra.mxu0 %v120
    %v328 = vpop.f32.mrf.mxu0
    %v329 = vadd.f32 0.0, %v328
    %330 = vmatmul.f32.gmra.mxu0 %v123
    %v331 = vpop.f32.mrf.mxu0
    %v332 = vadd.f32 0.0, %v331
    %333 = vmatmul.f32.gmra.mxu0 %v126
    %v334 = vpop.f32.mrf.mxu0
    %v335 = vadd.f32 0.0, %v334
    %336 = vmatmul.f32.gmra.mxu0 %v129
    %v337 = vpop.f32.mrf.mxu0
    %v338 = vadd.f32 0.0, %v337
    %339 = vmatmul.f32.gmra.mxu0 %v132
    %v340 = vpop.f32.mrf.mxu0
    %v341 = vadd.f32 0.0, %v340
    %342 = vmatmul.f32.gmra.mxu0 %v135
    %v343 = vpop.f32.mrf.mxu0
    %v344 = vadd.f32 0.0, %v343
    %345 = vmatmul.f32.gmra.mxu0 %v138
    %v346 = vpop.f32.mrf.mxu0
    %v347 = vadd.f32 0.0, %v346
    %348 = vmatmul.f32.gmra.mxu0 %v141
    %v349 = vpop.f32.mrf.mxu0
    %v350 = vadd.f32 0.0, %v349
    %351 = vmatmul.f32.gmra.mxu0 %v144
    %v352 = vpop.f32.mrf.mxu0
    %v353 = vadd.f32 0.0, %v352
    %354 = vmatmul.f32.gmra.mxu0 %v147
    %v355 = vpop.f32.mrf.mxu0
    %v356 = vadd.f32 0.0, %v355
    %357 = vmatmul.f32.gmra.mxu0 %v150
    %v358 = vpop.f32.mrf.mxu0
    %v359 = vadd.f32 0.0, %v358
    %360 = vmatmul.f32.gmra.mxu0 %v153
    %v361 = vpop.f32.mrf.mxu0
    %v362 = vadd.f32 0.0, %v361
    %363 = vmatmul.f32.gmra.mxu0 %v156
    %v364 = vpop.f32.mrf.mxu0
    %v365 = vadd.f32 0.0, %v364
    %366 = vmatmul.f32.gmra.mxu0 %v159
    %v367 = vpop.f32.mrf.mxu0
    %v368 = vadd.f32 0.0, %v367
    %369 = vmatmul.f32.gmra.mxu0 %v162
    %v370 = vpop.f32.mrf.mxu0
    %v371 = vadd.f32 0.0, %v370
    %372 = vmatmul.f32.gmra.mxu0 %v165
    %v373 = vpop.f32.mrf.mxu0
    %v374 = vadd.f32 0.0, %v373
    %375 = vmatmul.f32.gmra.mxu0 %v168
    %v376 = vpop.f32.mrf.mxu0
    %v377 = vadd.f32 0.0, %v376
    %378 = vmatmul.f32.gmra.mxu0 %v171
    %v379 = vpop.f32.mrf.mxu0
    %v380 = vadd.f32 0.0, %v379
    %381 = vmatmul.f32.gmra.mxu0 %v174
    %v382 = vpop.f32.mrf.mxu0
    %v383 = vadd.f32 0.0, %v382
    %384 = vmatmul.f32.gmra.mxu0 %v177
    %v385 = vpop.f32.mrf.mxu0
    %v386 = vadd.f32 0.0, %v385
    %387 = vmatmul.f32.gmra.mxu0 %v180
    %v388 = vpop.f32.mrf.mxu0
    %v389 = vadd.f32 0.0, %v388
    %390 = vmatmul.f32.gmra.mxu0 %v183
    %v391 = vpop.f32.mrf.mxu0
    %v392 = vadd.f32 0.0, %v391
    %393 = vmatmul.f32.gmra.mxu0 %v186
    %v394 = vpop.f32.mrf.mxu0
    %v395 = vadd.f32 0.0, %v394
    %396 = vmatmul.f32.gmra.mxu0 %v189
    %v397 = vpop.f32.mrf.mxu0
    %v398 = vadd.f32 0.0, %v397
    %399 = vmatmul.f32.gmra.mxu0 %v192
    %v400 = vpop.f32.mrf.mxu0
    %v401 = vadd.f32 0.0, %v400
    %402 = vmatmul.f32.gmra.mxu0 %v195
    %v403 = vpop.f32.mrf.mxu0
    %v404 = vadd.f32 0.0, %v403
    %405 = vmatmul.f32.gmra.mxu0 %v198
    %v406 = vpop.f32.mrf.mxu0
    %v407 = vadd.f32 0.0, %v406
    %408 = vmatmul.f32.gmra.mxu0 %v201
    %v409 = vpop.f32.mrf.mxu0
    %v410 = vadd.f32 0.0, %v409
    %411 = vmatmul.f32.gmra.mxu0 %v204
    %v412 = vpop.f32.mrf.mxu0
    %v413 = vadd.f32 0.0, %v412
    %414 = vmatmul.f32.gmra.mxu0 %v207
    %v415 = vpop.f32.mrf.mxu0
    %v416 = vadd.f32 0.0, %v415
    %417 = vmatmul.f32.gmra.mxu0 %v210
    %v418 = vpop.f32.mrf.mxu0
    %v419 = vadd.f32 0.0, %v418
    %420 = vmatmul.f32.gmra.mxu0 %v213
    %v421 = vpop.f32.mrf.mxu0
    %v422 = vadd.f32 0.0, %v421
    %423 = vmatmul.f32.gmra.mxu0 %v216
    %v424 = vpop.f32.mrf.mxu0
    %v425 = vadd.f32 0.0, %v424
    %426 = vmatmul.f32.gmra.mxu0 %v219
    %v427 = vpop.f32.mrf.mxu0
    %v428 = vadd.f32 0.0, %v427
    %429 = vmatmul.f32.gmra.mxu0 %v222
    %v430 = vpop.f32.mrf.mxu0
    %v431 = vadd.f32 0.0, %v430
    %432 = vmatmul.f32.gmra.mxu0 %v225
    %v433 = vpop.f32.mrf.mxu0
    %v434 = vadd.f32 0.0, %v433
    %435 = vmatmul.f32.gmra.mxu0 %v228
    %v436 = vpop.f32.mrf.mxu0
    %v437 = vadd.f32 0.0, %v436
    %438 = vmatmul.f32.gmra.mxu0 %v231
    %v439 = vpop.f32.mrf.mxu0
    %v440 = vadd.f32 0.0, %v439
    %441 = vmatmul.f32.gmra.mxu0 %v234
    %v442 = vpop.f32.mrf.mxu0
    %v443 = vadd.f32 0.0, %v442
    %444 = vmatmul.f32.gmra.mxu0 %v237
    %v445 = vpop.f32.mrf.mxu0
    %v446 = vadd.f32 0.0, %v445
    %447 = vmatmul.f32.gmra.mxu0 %v240
    %v448 = vpop.f32.mrf.mxu0
    %v449 = vadd.f32 0.0, %v448
    %450 = vmatmul.f32.gmra.mxu0 %v243
    %v451 = vpop.f32.mrf.mxu0
    %v452 = vadd.f32 0.0, %v451
    %453 = vmatmul.f32.gmra.mxu0 %v246
    %v454 = vpop.f32.mrf.mxu0
    %v455 = vadd.f32 0.0, %v454
    %456 = vmatmul.f32.gmra.mxu0 %v249
    %v457 = vpop.f32.mrf.mxu0
    %v458 = vadd.f32 0.0, %v457
    %459 = vmatmul.f32.gmra.mxu0 %v252
    %v460 = vpop.f32.mrf.mxu0
    %v461 = vadd.f32 0.0, %v460
    %462 = vmatmul.f32.gmra.mxu0 %v255
    %v463 = vpop.f32.mrf.mxu0
    %v464 = vadd.f32 0.0, %v463
    %465 = vmatmul.f32.gmra.mxu0 %v258
    %v466 = vpop.f32.mrf.mxu0
    %v467 = vadd.f32 0.0, %v466
    %468 = vmatmul.f32.gmra.mxu0 %v261
    %v469 = vpop.f32.mrf.mxu0
    %v470 = vadd.f32 0.0, %v469
    %471 = vmatmul.f32.gmra.mxu0 %v264
    %v472 = vpop.f32.mrf.mxu0
    %v473 = vadd.f32 0.0, %v472
    %474 = vmatmul.f32.gmra.mxu0 %v267
    %v475 = vpop.f32.mrf.mxu0
    %v476 = vadd.f32 0.0, %v475
    %477 = vmatmul.f32.gmra.mxu0 %v270
    %v478 = vpop.f32.mrf.mxu0
    %v479 = vadd.f32 0.0, %v478
    %480 = vdwg.mxu0
    %vm481 = vcmask 31744
    %482 = vst.msk [vmem:[%s2] sm:$0xff] %vm481, %v290
    %483 = vst.msk [vmem:[%s2 + $0x8] sm:$0xff] %vm481, %v293
    %484 = vst.msk [vmem:[%s2 + $0x10] sm:$0xff] %vm481, %v296
    %485 = vst.msk [vmem:[%s2 + $0x18] sm:$0xff] %vm481, %v299
    %486 = vst.msk [vmem:[%s2 + $0x20] sm:$0xff] %vm481, %v302
    %487 = vst.msk [vmem:[%s2 + $0x28] sm:$0xff] %vm481, %v305
    %488 = vst.msk [vmem:[%s2 + $0x30] sm:$0xff] %vm481, %v308
    %489 = vst.msk [vmem:[%s2 + $0x38] sm:$0xff] %vm481, %v311
    %490 = vst.msk [vmem:[%s2 + $0x40] sm:$0xff] %vm481, %v314
    %491 = vst.msk [vmem:[%s2 + $0x48] sm:$0xff] %vm481, %v317
    %492 = vst.msk [vmem:[%s2 + $0x50] sm:$0xff] %vm481, %v320
    %493 = vst.msk [vmem:[%s2 + $0x58] sm:$0xff] %vm481, %v323
    %494 = vst.msk [vmem:[%s2 + $0x60] sm:$0xff] %vm481, %v326
    %495 = vst.msk [vmem:[%s2 + $0x68] sm:$0xff] %vm481, %v329
    %496 = vst.msk [vmem:[%s2 + $0x70] sm:$0xff] %vm481, %v332
    %497 = vst.msk [vmem:[%s2 + $0x78] sm:$0xff] %vm481, %v335
    %498 = vst.msk [vmem:[%s2 + $0x80] sm:$0xff] %vm481, %v338
    %499 = vst.msk [vmem:[%s2 + $0x88] sm:$0xff] %vm481, %v341
    %500 = vst.msk [vmem:[%s2 + $0x90] sm:$0xff] %vm481, %v344
    %501 = vst.msk [vmem:[%s2 + $0x98] sm:$0xff] %vm481, %v347
    %502 = vst.msk [vmem:[%s2 + $0xa0] sm:$0xff] %vm481, %v350
    %503 = vst.msk [vmem:[%s2 + $0xa8] sm:$0xff] %vm481, %v353
    %504 = vst.msk [vmem:[%s2 + $0xb0] sm:$0xff] %vm481, %v356
    %505 = vst.msk [vmem:[%s2 + $0xb8] sm:$0xff] %vm481, %v359
    %506 = vst.msk [vmem:[%s2 + $0xc0] sm:$0xff] %vm481, %v362
    %507 = vst.msk [vmem:[%s2 + $0xc8] sm:$0xff] %vm481, %v365
    %508 = vst.msk [vmem:[%s2 + $0xd0] sm:$0xff] %vm481, %v368
    %509 = vst.msk [vmem:[%s2 + $0xd8] sm:$0xff] %vm481, %v371
    %510 = vst.msk [vmem:[%s2 + $0xe0] sm:$0xff] %vm481, %v374
    %511 = vst.msk [vmem:[%s2 + $0xe8] sm:$0xff] %vm481, %v377
    %512 = vst.msk [vmem:[%s2 + $0xf0] sm:$0xff] %vm481, %v380
    %513 = vst.msk [vmem:[%s2 + $0xf8] sm:$0xff] %vm481, %v383
    %514 = vst.msk [vmem:[%s2 + $0x100] sm:$0xff] %vm481, %v386
    %515 = vst.msk [vmem:[%s2 + $0x108] sm:$0xff] %vm481, %v389
    %516 = vst.msk [vmem:[%s2 + $0x110] sm:$0xff] %vm481, %v392
    %517 = vst.msk [vmem:[%s2 + $0x118] sm:$0xff] %vm481, %v395
    %518 = vst.msk [vmem:[%s2 + $0x120] sm:$0xff] %vm481, %v398
    %519 = vst.msk [vmem:[%s2 + $0x128] sm:$0xff] %vm481, %v401
    %520 = vst.msk [vmem:[%s2 + $0x130] sm:$0xff] %vm481, %v404
    %521 = vst.msk [vmem:[%s2 + $0x138] sm:$0xff] %vm481, %v407
    %522 = vst.msk [vmem:[%s2 + $0x140] sm:$0xff] %vm481, %v410
    %523 = vst.msk [vmem:[%s2 + $0x148] sm:$0xff] %vm481, %v413
    %524 = vst.msk [vmem:[%s2 + $0x150] sm:$0xff] %vm481, %v416
    %525 = vst.msk [vmem:[%s2 + $0x158] sm:$0xff] %vm481, %v419
    %526 = vst.msk [vmem:[%s2 + $0x160] sm:$0xff] %vm481, %v422
    %527 = vst.msk [vmem:[%s2 + $0x168] sm:$0xff] %vm481, %v425
    %528 = vst.msk [vmem:[%s2 + $0x170] sm:$0xff] %vm481, %v428
    %529 = vst.msk [vmem:[%s2 + $0x178] sm:$0xff] %vm481, %v431
    %530 = vst.msk [vmem:[%s2 + $0x180] sm:$0xff] %vm481, %v434
    %531 = vst.msk [vmem:[%s2 + $0x188] sm:$0xff] %vm481, %v437
    %532 = vst.msk [vmem:[%s2 + $0x190] sm:$0xff] %vm481, %v440
    %533 = vst.msk [vmem:[%s2 + $0x198] sm:$0xff] %vm481, %v443
    %534 = vst.msk [vmem:[%s2 + $0x1a0] sm:$0xff] %vm481, %v446
    %535 = vst.msk [vmem:[%s2 + $0x1a8] sm:$0xff] %vm481, %v449
    %536 = vst.msk [vmem:[%s2 + $0x1b0] sm:$0xff] %vm481, %v452
    %537 = vst.msk [vmem:[%s2 + $0x1b8] sm:$0xff] %vm481, %v455
    %538 = vst.msk [vmem:[%s2 + $0x1c0] sm:$0xff] %vm481, %v458
    %539 = vst.msk [vmem:[%s2 + $0x1c8] sm:$0xff] %vm481, %v461
    %540 = vst.msk [vmem:[%s2 + $0x1d0] sm:$0xff] %vm481, %v464
    %541 = vst.msk [vmem:[%s2 + $0x1d8] sm:$0xff] %vm481, %v467
    %542 = vst.msk [vmem:[%s2 + $0x1e0] sm:$0xff] %vm481, %v470
    %543 = vst.msk [vmem:[%s2 + $0x1e8] sm:$0xff] %vm481, %v473
    %544 = vst.msk [vmem:[%s2 + $0x1f0] sm:$0xff] %vm481, %v476
    %545 = vst.msk [vmem:[%s2 + $0x1f8] sm:$0xff] %vm481, %v479
    %v546 = vsel %vm481, %v290, 0.0
    %v547 = vsel %vm481, %v293, 0.0
    %v548 = vadd.f32 %v546, %v547
    %v549 = vsel %vm481, %v296, 0.0
    %v550 = vadd.f32 %v548, %v549
    %v551 = vsel %vm481, %v299, 0.0
    %v552 = vadd.f32 %v550, %v551
    %v553 = vsel %vm481, %v302, 0.0
    %v554 = vadd.f32 %v552, %v553
    %v555 = vsel %vm481, %v305, 0.0
    %v556 = vadd.f32 %v554, %v555
    %v557 = vsel %vm481, %v308, 0.0
    %v558 = vadd.f32 %v556, %v557
    %v559 = vsel %vm481, %v311, 0.0
    %v560 = vadd.f32 %v558, %v559
    %v561 = vsel %vm481, %v314, 0.0
    %v562 = vadd.f32 %v560, %v561
    %v563 = vsel %vm481, %v317, 0.0
    %v564 = vadd.f32 %v562, %v563
    %v565 = vsel %vm481, %v320, 0.0
    %v566 = vadd.f32 %v564, %v565
    %v567 = vsel %vm481, %v323, 0.0
    %v568 = vadd.f32 %v566, %v567
    %v569 = vsel %vm481, %v326, 0.0
    %v570 = vadd.f32 %v568, %v569
    %v571 = vsel %vm481, %v329, 0.0
    %v572 = vadd.f32 %v570, %v571
    %v573 = vsel %vm481, %v332, 0.0
    %v574 = vadd.f32 %v572, %v573
    %v575 = vsel %vm481, %v335, 0.0
    %v576 = vadd.f32 %v574, %v575
    %v577 = vsel %vm481, %v338, 0.0
    %v578 = vadd.f32 %v576, %v577
    %v579 = vsel %vm481, %v341, 0.0
    %v580 = vadd.f32 %v578, %v579
    %v581 = vsel %vm481, %v344, 0.0
    %v582 = vadd.f32 %v580, %v581
    %v583 = vsel %vm481, %v347, 0.0
    %v584 = vadd.f32 %v582, %v583
    %v585 = vsel %vm481, %v350, 0.0
    %v586 = vadd.f32 %v584, %v585
    %v587 = vsel %vm481, %v353, 0.0
    %v588 = vadd.f32 %v586, %v587
    %v589 = vsel %vm481, %v356, 0.0
    %v590 = vadd.f32 %v588, %v589
    %v591 = vsel %vm481, %v359, 0.0
    %v592 = vadd.f32 %v590, %v591
    %v593 = vsel %vm481, %v362, 0.0
    %v594 = vadd.f32 %v592, %v593
    %v595 = vsel %vm481, %v365, 0.0
    %v596 = vadd.f32 %v594, %v595
    %v597 = vsel %vm481, %v368, 0.0
    %v598 = vadd.f32 %v596, %v597
    %v599 = vsel %vm481, %v371, 0.0
    %v600 = vadd.f32 %v598, %v599
    %v601 = vsel %vm481, %v374, 0.0
    %v602 = vadd.f32 %v600, %v601
    %v603 = vsel %vm481, %v377, 0.0
    %v604 = vadd.f32 %v602, %v603
    %v605 = vsel %vm481, %v380, 0.0
    %v606 = vadd.f32 %v604, %v605
    %v607 = vsel %vm481, %v383, 0.0
    %v608 = vadd.f32 %v606, %v607
    %v609 = vsel %vm481, %v386, 0.0
    %v610 = vadd.f32 %v608, %v609
    %v611 = vsel %vm481, %v389, 0.0
    %v612 = vadd.f32 %v610, %v611
    %v613 = vsel %vm481, %v392, 0.0
    %v614 = vadd.f32 %v612, %v613
    %v615 = vsel %vm481, %v395, 0.0
    %v616 = vadd.f32 %v614, %v615
    %v617 = vsel %vm481, %v398, 0.0
    %v618 = vadd.f32 %v616, %v617
    %v619 = vsel %vm481, %v401, 0.0
    %v620 = vadd.f32 %v618, %v619
    %v621 = vsel %vm481, %v404, 0.0
    %v622 = vadd.f32 %v620, %v621
    %v623 = vsel %vm481, %v407, 0.0
    %v624 = vadd.f32 %v622, %v623
    %v625 = vsel %vm481, %v410, 0.0
    %v626 = vadd.f32 %v624, %v625
    %v627 = vsel %vm481, %v413, 0.0
    %v628 = vadd.f32 %v626, %v627
    %v629 = vsel %vm481, %v416, 0.0
    %v630 = vadd.f32 %v628, %v629
    %v631 = vsel %vm481, %v419, 0.0
    %v632 = vadd.f32 %v630, %v631
    %v633 = vsel %vm481, %v422, 0.0
    %v634 = vadd.f32 %v632, %v633
    %v635 = vsel %vm481, %v425, 0.0
    %v636 = vadd.f32 %v634, %v635
    %v637 = vsel %vm481, %v428, 0.0
    %v638 = vadd.f32 %v636, %v637
    %v639 = vsel %vm481, %v431, 0.0
    %v640 = vadd.f32 %v638, %v639
    %v641 = vsel %vm481, %v434, 0.0
    %v642 = vadd.f32 %v640, %v641
    %v643 = vsel %vm481, %v437, 0.0
    %v644 = vadd.f32 %v642, %v643
    %v645 = vsel %vm481, %v440, 0.0
    %v646 = vadd.f32 %v644, %v645
    %v647 = vsel %vm481, %v443, 0.0
    %v648 = vadd.f32 %v646, %v647
    %v649 = vsel %vm481, %v446, 0.0
    %v650 = vadd.f32 %v648, %v649
    %v651 = vsel %vm481, %v449, 0.0
    %v652 = vadd.f32 %v650, %v651
    %v653 = vsel %vm481, %v452, 0.0
    %v654 = vadd.f32 %v652, %v653
    %v655 = vsel %vm481, %v455, 0.0
    %v656 = vadd.f32 %v654, %v655
    %v657 = vsel %vm481, %v458, 0.0
    %v658 = vadd.f32 %v656, %v657
    %v659 = vsel %vm481, %v461, 0.0
    %v660 = vadd.f32 %v658, %v659
    %v661 = vsel %vm481, %v464, 0.0
    %v662 = vadd.f32 %v660, %v661
    %v663 = vsel %vm481, %v467, 0.0
    %v664 = vadd.f32 %v662, %v663
    %v665 = vsel %vm481, %v470, 0.0
    %v666 = vadd.f32 %v664, %v665
    %v667 = vsel %vm481, %v473, 0.0
    %v668 = vadd.f32 %v666, %v667
    %v669 = vsel %vm481, %v476, 0.0
    %v670 = vadd.f32 %v668, %v669
    %v671 = vsel %vm481, %v479, 0.0
    %v672 = vadd.f32 %v670, %v671
    %v673 = vrot.slane %v672, 4
    %v674 = vadd.f32 %v672, %v673
    %v675 = vrot.slane %v674, 2
    %v676 = vadd.f32 %v674, %v675
    %v677 = vrot.slane %v676, 1
    %v678 = vadd.f32 %v676, %v677
    %v679 = vmul.f32 %v290, %v290
    %v680 = vmul.f32 %v293, %v293
    %v681 = vmul.f32 %v296, %v296
    %v682 = vmul.f32 %v299, %v299
    %v683 = vmul.f32 %v302, %v302
    %v684 = vmul.f32 %v305, %v305
    %v685 = vmul.f32 %v308, %v308
    %v686 = vmul.f32 %v311, %v311
    %v687 = vmul.f32 %v314, %v314
    %v688 = vmul.f32 %v317, %v317
    %v689 = vmul.f32 %v320, %v320
    %v690 = vmul.f32 %v323, %v323
    %v691 = vmul.f32 %v326, %v326
    %v692 = vmul.f32 %v329, %v329
    %v693 = vmul.f32 %v332, %v332
    %v694 = vmul.f32 %v335, %v335
    %v695 = vmul.f32 %v338, %v338
    %v696 = vmul.f32 %v341, %v341
    %v697 = vmul.f32 %v344, %v344
    %v698 = vmul.f32 %v347, %v347
    %v699 = vmul.f32 %v350, %v350
    %v700 = vmul.f32 %v353, %v353
    %v701 = vmul.f32 %v356, %v356
    %v702 = vmul.f32 %v359, %v359
    %v703 = vmul.f32 %v362, %v362
    %v704 = vmul.f32 %v365, %v365
    %v705 = vmul.f32 %v368, %v368
    %v706 = vmul.f32 %v371, %v371
    %v707 = vmul.f32 %v374, %v374
    %v708 = vmul.f32 %v377, %v377
    %v709 = vmul.f32 %v380, %v380
    %v710 = vmul.f32 %v383, %v383
    %v711 = vmul.f32 %v386, %v386
    %v712 = vmul.f32 %v389, %v389
    %v713 = vmul.f32 %v392, %v392
    %v714 = vmul.f32 %v395, %v395
    %v715 = vmul.f32 %v398, %v398
    %v716 = vmul.f32 %v401, %v401
    %v717 = vmul.f32 %v404, %v404
    %v718 = vmul.f32 %v407, %v407
    %v719 = vmul.f32 %v410, %v410
    %v720 = vmul.f32 %v413, %v413
    %v721 = vmul.f32 %v416, %v416
    %v722 = vmul.f32 %v419, %v419
    %v723 = vmul.f32 %v422, %v422
    %v724 = vmul.f32 %v425, %v425
    %v725 = vmul.f32 %v428, %v428
    %v726 = vmul.f32 %v431, %v431
    %v727 = vmul.f32 %v434, %v434
    %v728 = vmul.f32 %v437, %v437
    %v729 = vmul.f32 %v440, %v440
    %v730 = vmul.f32 %v443, %v443
    %v731 = vmul.f32 %v446, %v446
    %v732 = vmul.f32 %v449, %v449
    %v733 = vmul.f32 %v452, %v452
    %v734 = vmul.f32 %v455, %v455
    %v735 = vmul.f32 %v458, %v458
    %v736 = vmul.f32 %v461, %v461
    %v737 = vmul.f32 %v464, %v464
    %v738 = vmul.f32 %v467, %v467
    %v739 = vmul.f32 %v470, %v470
    %v740 = vmul.f32 %v473, %v473
    %v741 = vmul.f32 %v476, %v476
    %v742 = vmul.f32 %v479, %v479
    %v743 = vsel %vm481, %v679, 0.0
    %v744 = vsel %vm481, %v680, 0.0
    %v745 = vadd.f32 %v743, %v744
    %v746 = vsel %vm481, %v681, 0.0
    %v747 = vadd.f32 %v745, %v746
    %v748 = vsel %vm481, %v682, 0.0
    %v749 = vadd.f32 %v747, %v748
    %v750 = vsel %vm481, %v683, 0.0
    %v751 = vadd.f32 %v749, %v750
    %v752 = vsel %vm481, %v684, 0.0
    %v753 = vadd.f32 %v751, %v752
    %v754 = vsel %vm481, %v685, 0.0
    %v755 = vadd.f32 %v753, %v754
    %v756 = vsel %vm481, %v686, 0.0
    %v757 = vadd.f32 %v755, %v756
    %v758 = vsel %vm481, %v687, 0.0
    %v759 = vadd.f32 %v757, %v758
    %v760 = vsel %vm481, %v688, 0.0
    %v761 = vadd.f32 %v759, %v760
    %v762 = vsel %vm481, %v689, 0.0
    %v763 = vadd.f32 %v761, %v762
    %v764 = vsel %vm481, %v690, 0.0
    %v765 = vadd.f32 %v763, %v764
    %v766 = vsel %vm481, %v691, 0.0
    %v767 = vadd.f32 %v765, %v766
    %v768 = vsel %vm481, %v692, 0.0
    %v769 = vadd.f32 %v767, %v768
    %v770 = vsel %vm481, %v693, 0.0
    %v771 = vadd.f32 %v769, %v770
    %v772 = vsel %vm481, %v694, 0.0
    %v773 = vadd.f32 %v771, %v772
    %v774 = vsel %vm481, %v695, 0.0
    %v775 = vadd.f32 %v773, %v774
    %v776 = vsel %vm481, %v696, 0.0
    %v777 = vadd.f32 %v775, %v776
    %v778 = vsel %vm481, %v697, 0.0
    %v779 = vadd.f32 %v777, %v778
    %v780 = vsel %vm481, %v698, 0.0
    %v781 = vadd.f32 %v779, %v780
    %v782 = vsel %vm481, %v699, 0.0
    %v783 = vadd.f32 %v781, %v782
    %v784 = vsel %vm481, %v700, 0.0
    %v785 = vadd.f32 %v783, %v784
    %v786 = vsel %vm481, %v701, 0.0
    %v787 = vadd.f32 %v785, %v786
    %v788 = vsel %vm481, %v702, 0.0
    %v789 = vadd.f32 %v787, %v788
    %v790 = vsel %vm481, %v703, 0.0
    %v791 = vadd.f32 %v789, %v790
    %v792 = vsel %vm481, %v704, 0.0
    %v793 = vadd.f32 %v791, %v792
    %v794 = vsel %vm481, %v705, 0.0
    %v795 = vadd.f32 %v793, %v794
    %v796 = vsel %vm481, %v706, 0.0
    %v797 = vadd.f32 %v795, %v796
    %v798 = vsel %vm481, %v707, 0.0
    %v799 = vadd.f32 %v797, %v798
    %v800 = vsel %vm481, %v708, 0.0
    %v801 = vadd.f32 %v799, %v800
    %v802 = vsel %vm481, %v709, 0.0
    %v803 = vadd.f32 %v801, %v802
    %v804 = vsel %vm481, %v710, 0.0
    %v805 = vadd.f32 %v803, %v804
    %v806 = vsel %vm481, %v711, 0.0
    %v807 = vadd.f32 %v805, %v806
    %v808 = vsel %vm481, %v712, 0.0
    %v809 = vadd.f32 %v807, %v808
    %v810 = vsel %vm481, %v713, 0.0
    %v811 = vadd.f32 %v809, %v810
    %v812 = vsel %vm481, %v714, 0.0
    %v813 = vadd.f32 %v811, %v812
    %v814 = vsel %vm481, %v715, 0.0
    %v815 = vadd.f32 %v813, %v814
    %v816 = vsel %vm481, %v716, 0.0
    %v817 = vadd.f32 %v815, %v816
    %v818 = vsel %vm481, %v717, 0.0
    %v819 = vadd.f32 %v817, %v818
    %v820 = vsel %vm481, %v718, 0.0
    %v821 = vadd.f32 %v819, %v820
    %v822 = vsel %vm481, %v719, 0.0
    %v823 = vadd.f32 %v821, %v822
    %v824 = vsel %vm481, %v720, 0.0
    %v825 = vadd.f32 %v823, %v824
    %v826 = vsel %vm481, %v721, 0.0
    %v827 = vadd.f32 %v825, %v826
    %v828 = vsel %vm481, %v722, 0.0
    %v829 = vadd.f32 %v827, %v828
    %v830 = vsel %vm481, %v723, 0.0
    %v831 = vadd.f32 %v829, %v830
    %v832 = vsel %vm481, %v724, 0.0
    %v833 = vadd.f32 %v831, %v832
    %v834 = vsel %vm481, %v725, 0.0
    %v835 = vadd.f32 %v833, %v834
    %v836 = vsel %vm481, %v726, 0.0
    %v837 = vadd.f32 %v835, %v836
    %v838 = vsel %vm481, %v727, 0.0
    %v839 = vadd.f32 %v837, %v838
    %v840 = vsel %vm481, %v728, 0.0
    %v841 = vadd.f32 %v839, %v840
    %v842 = vsel %vm481, %v729, 0.0
    %v843 = vadd.f32 %v841, %v842
    %v844 = vsel %vm481, %v730, 0.0
    %v845 = vadd.f32 %v843, %v844
    %v846 = vsel %vm481, %v731, 0.0
    %v847 = vadd.f32 %v845, %v846
    %v848 = vsel %vm481, %v732, 0.0
    %v849 = vadd.f32 %v847, %v848
    %v850 = vsel %vm481, %v733, 0.0
    %v851 = vadd.f32 %v849, %v850
    %v852 = vsel %vm481, %v734, 0.0
    %v853 = vadd.f32 %v851, %v852
    %v854 = vsel %vm481, %v735, 0.0
    %v855 = vadd.f32 %v853, %v854
    %v856 = vsel %vm481, %v736, 0.0
    %v857 = vadd.f32 %v855, %v856
    %v858 = vsel %vm481, %v737, 0.0
    %v859 = vadd.f32 %v857, %v858
    %v860 = vsel %vm481, %v738, 0.0
    %v861 = vadd.f32 %v859, %v860
    %v862 = vsel %vm481, %v739, 0.0
    %v863 = vadd.f32 %v861, %v862
    %v864 = vsel %vm481, %v740, 0.0
    %v865 = vadd.f32 %v863, %v864
    %v866 = vsel %vm481, %v741, 0.0
    %v867 = vadd.f32 %v865, %v866
    %v868 = vsel %vm481, %v742, 0.0
    %v869 = vadd.f32 %v867, %v868
    %v870 = vrot.slane %v869, 4
    %v871 = vadd.f32 %v869, %v870
    %v872 = vrot.slane %v871, 2
    %v873 = vadd.f32 %v871, %v872
    %v874 = vrot.slane %v873, 1
    %v875 = vadd.f32 %v873, %v874
    %vm876 = vcmask 1040384
    %v877 = vsel %vm876, %v678, %v875
    %vm878 = vcmask 25600
    %879 = vst.msk [vmem:[#allocation2] sm:$0x3] %vm878, %v877
    // Predicated region
    $region10: #{tpu_custom_call.1} parent=1 // pred_check
      _
    $region11: #{tpu_custom_call.1} parent=1 // pred_check_branch
      %881 = sbr.rel (0) target = $region13
    $region12: #{tpu_custom_call.1} parent=1 // pred_region
      _
    $region13: #{tpu_custom_call.1} parent=1 // pred_fallthru
      _
    // Predicated region
    $region14: #{tpu_custom_call.1} parent=1 // pred_check
      _
    $region15: #{tpu_custom_call.1} parent=1 // pred_check_branch
      %883 = sbr.rel (0) target = $region17
    $region16: #{tpu_custom_call.1} parent=1 // pred_region
      %885 = vsyncadd [#allocation3], 0
      %s887 = sshll.u32 [#allocation2], 4
      %s888 = int_to_ptr.vmem [resolvable:$true] %s887
      %s889 = sshll.u32 %s3, 4
      %s890 = int_to_ptr.hbm [resolvable:$true] %s889
      %892 = dma.vmem_to_hbm [thread:$0]  %s888, 32, %s890, [#allocation3]
    $region17: #{tpu_custom_call.1} parent=1 // pred_fallthru
      _
    // Predicated region
    $region18: #{tpu_custom_call.1} parent=1 // pred_check
      _
    $region19: #{tpu_custom_call.1} parent=1 // pred_check_branch
      %894 = sbr.rel (0) target = $region21
    $region20: #{tpu_custom_call.1} parent=1 // pred_region
      _
    $region21: #{tpu_custom_call.1} parent=1 // pred_fallthru
      _
    // Predicated region
    $region22: #{tpu_custom_call.1} parent=1 // pred_check
      _
    $region23: #{tpu_custom_call.1} parent=1 // pred_check_branch
      %896 = sbr.rel (0) target = $region25
    $region24: #{tpu_custom_call.1} parent=1 // pred_region
      %898 = dma.done [#allocation3], 32
    $region25: #{tpu_custom_call.1} parent=1 // pred_fallthru
      _
    %899 = vsyncpa [#allocation3], 1

</llo_original>
